<compile_context>
chip_gen: v7x
topology: tpu7x:2x2x1
jax: 0.10.0
libtpu: 0.0.40
codegen_flags: <defaults>
</compile_context>

<pallas_src>
import functools

import jax
import jax.numpy as jnp
from jax import lax
from jax.experimental import pallas as pl
from jax.experimental.pallas import tpu as pltpu


def _round_up(x: int, m: int) -> int:
    return (x + m - 1) // m * m


def _sublane_multiple(dtype) -> int:
    # f32 -> 8, bf16 -> 16, int8/fp8 -> 32 rows per native sublane tile.
    return max(8, 32 // jnp.dtype(dtype).itemsize)


def _vmem_capacity_bytes() -> int:
    try:
        cap = getattr(pltpu.get_tpu_info(), "vmem_capacity_bytes", None)
        if cap:
            return int(cap)
    except Exception:
        pass
    return 128 << 20  # v5e/v6e physical VMEM


def _multi_tensorcore_chip() -> bool:
    # v7x (and v4/v5p) have 2 TensorCores per chip; v5e/v6e have 1.
    try:
        kind = jax.devices()[0].device_kind.lower()
    except Exception:
        return False
    return any(t in kind for t in ("v7", "7x", "v4", "v5p"))


def _choose_tiling(n, c, pred_dtype, teacher_dtype):
    """Pick a row tile from a byte budget (C-, dtype- and generation-aware)."""
    sub = max(_sublane_multiple(pred_dtype), _sublane_multiple(teacher_dtype))
    bytes_per_row = c * (jnp.dtype(pred_dtype).itemsize +
                         jnp.dtype(teacher_dtype).itemsize)
    vmem_cap = _vmem_capacity_bytes()
    # Stream ~1/8 of physical VMEM of pred+teacher per grid step (16 MiB on 128-MiB
    # v5e/v6e, 8 MiB on 64-MiB v7x): big enough that the ~0.35 us fixed per-step cost
    # is a small fraction of the HBM time, small enough to double-buffer comfortably.
    per_step_target = min(16 << 20, vmem_cap // 8)
    tn = max(sub, (per_step_target // max(bytes_per_row, 1)) // sub * sub)
    tn = min(tn, _round_up(n, sub))
    # Scoped-VMEM request: double-buffered inputs + slack, >= 32 MiB, <= 3/4 physical.
    per_step_bytes = tn * bytes_per_row
    vmem_limit = int(min(vmem_cap * 3 // 4,
                         max(2 * per_step_bytes + (2 << 20), 32 << 20)))
    return tn, vmem_limit


def _focal_ce_kernel(pred_ref, teacher_ref, out_ref, *,
                     n_total, tile_n, mask_rows, accumulate):
    """Partial sum over a (tile_n, C) row block of (logsumexp(pred) - pred[target])."""
    pred = pred_ref[...].astype(jnp.float32)        # (TN, C)
    teacher = teacher_ref[...].astype(jnp.float32)  # (TN, C)
    rows, c = pred.shape

    # target = teacher.argmax(axis=1) (first-occurrence tie-break) as a one-hot mask —
    # avoids any integer gather on TPU.
    class_iota = lax.broadcasted_iota(jnp.int32, (rows, c), 1)
    t_max = jnp.max(teacher, axis=-1, keepdims=True)
    first_idx = jnp.min(
        jnp.where(teacher == t_max, class_iota, jnp.int32(c)),
        axis=-1, keepdims=True)
    onehot = class_iota == first_idx                                       # (TN, C)

    # picked logit pred[i, target_i]
    picked = jnp.sum(jnp.where(onehot, pred, 0.0), axis=-1, keepdims=True)  # (TN, 1)

    # stable logsumexp over classes
    p_max = jnp.max(pred, axis=-1, keepdims=True)
    lse = p_max + jnp.log(jnp.sum(jnp.exp(pred - p_max), axis=-1, keepdims=True))
    ce = lse - picked                                                       # (TN, 1)

    if mask_rows:
        # Only emitted when N % tile_n != 0 (statically known); all-true on interior
        # tiles and hidden under the HBM stream anyway.
        row_iota = lax.broadcasted_iota(jnp.int32, (rows, 1), 0)
        ce = jnp.where(pl.program_id(0) * tile_n + row_iota < n_total, ce, 0.0)

    psum = jnp.sum(ce, axis=0, keepdims=True)                               # (1, 1)

    if accumulate:
        # Single resident accumulator (single-TC chips): no per-step writeback DMA.
        @pl.when(pl.program_id(0) == 0)
        def _():
            out_ref[...] = jnp.zeros_like(out_ref)
        out_ref[...] += psum
    else:
        # Per-tile partial sum (multi-TC chips; "parallel" grid axis shards tiles).
        out_ref[...] = psum


@functools.partial(jax.jit, static_argnames=("gamma",))
def focal_loss(pred, teacher, gamma=2.0):
    """Pallas FocalLoss forward. pred/teacher: (N, C), f32 or bf16. Returns (1,) f32."""
    n, c = pred.shape
    assert teacher.shape == (n, c), (pred.shape, teacher.shape)

    tn, vmem_limit = _choose_tiling(n, c, pred.dtype, teacher.dtype)
    num_tiles = int(pl.cdiv(n, tn))
    mask_rows = (n % tn) != 0

    # v7x: per-tile partials + "parallel" so both TensorCores split the tile loop.
    # v5e/v6e (single TC): resident accumulator + "arbitrary" (parallel-vs-arbitrary is
    # measured ~0 there, and the accumulator removes the per-step (1,1) writeback).
    use_partials = _multi_tensorcore_chip() and num_tiles > 1

    kernel = functools.partial(
        _focal_ce_kernel, n_total=n, tile_n=tn,
        mask_rows=mask_rows, accumulate=not use_partials)

    if use_partials:
        out_shape = jax.ShapeDtypeStruct((num_tiles, 1), jnp.float32)
        out_spec = pl.BlockSpec((1, 1), lambda i: (i, 0))
        semantics = ("parallel",)
    else:
        out_shape = jax.ShapeDtypeStruct((1, 1), jnp.float32)
        out_spec = pl.BlockSpec((1, 1), lambda i: (0, 0))
        semantics = ("arbitrary",)

    # NOTE: pipeline_mode=pl.Buffered(3) on the inputs is a possible few-% follow-up
    # once a bundle dump shows exposed DMA jitter; skipped to keep VMEM headroom (v7x).
    ce_sums = pl.pallas_call(
        kernel,
        out_shape=out_shape,
        grid=(num_tiles,),
        in_specs=[
            pl.BlockSpec((tn, c), lambda i: (i, 0)),
            pl.BlockSpec((tn, c), lambda i: (i, 0)),
        ],
        out_specs=out_spec,
        compiler_params=pltpu.CompilerParams(
            dimension_semantics=semantics,
            vmem_limit_bytes=vmem_limit),
    )(pred, teacher)

    # Scalar finalize (a handful of ops) in the wrapper: global mean + focal transform.
    ce_mean = jnp.sum(ce_sums) / jnp.float32(n)
    logpt = -ce_mean
    pt = jnp.exp(logpt)
    # exp(-ce) can round to just above 1 when ce ~ 0; clamp so a non-integer gamma
    # cannot produce NaN (same latent issue exists in the PyTorch original).
    one_m_pt = jnp.maximum(1.0 - pt, 0.0)
    focal_w = one_m_pt * one_m_pt if gamma == 2.0 else one_m_pt ** jnp.float32(gamma)
    loss = -focal_w * logpt
    # torch: loss.view(1, -1).mean(dim=-1) -> shape (1,)
    return loss.reshape(1)


def focal_loss_ref(pred, teacher, gamma=2.0):
    # pure-JAX reference of the PyTorch forward
    pred = pred.astype(jnp.float32)
    teacher = teacher.astype(jnp.float32)
    target = jnp.argmax(teacher, axis=1)
    lse = jax.scipy.special.logsumexp(pred, axis=-1)
    picked = jnp.take_along_axis(pred, target[:, None], axis=-1)[:, 0]
    ce = jnp.mean(lse - picked)
    logpt = -ce
    pt = jnp.exp(logpt)
    loss = -((1.0 - pt) ** gamma) * logpt
    return loss.reshape(1)


if __name__ == "__main__":
    key = jax.random.PRNGKey(0)
    k1, k2 = jax.random.split(key)
    N, C = 8, 16
    pred = jax.random.normal(k1, (N, C), dtype=jnp.float32)
    # "teacher" is a (soft) label distribution; argmax over classes is taken.
    teacher = jax.nn.softmax(jax.random.normal(k2, (N, C), dtype=jnp.float32), axis=-1)

    # f32 path: must match the reference tightly.
    out = jax.block_until_ready(focal_loss(pred, teacher))
    ref = focal_loss_ref(pred, teacher)
    assert out.shape == (1,)
    assert jnp.allclose(out, ref, atol=1e-5, rtol=1e-5), (out, ref)

    # Mixed precision: bf16 teacher (only its argmax is used) with f32 pred —
    # ~25% less HBM traffic; kernel upcasts to f32 internally.
    teacher_bf16 = teacher.astype(jnp.bfloat16)
    out_mixed = jax.block_until_ready(focal_loss(pred, teacher_bf16))
    ref_mixed = focal_loss_ref(pred, teacher_bf16.astype(jnp.float32))
    assert jnp.allclose(out_mixed, ref_mixed, atol=1e-5, rtol=1e-5), (out_mixed, ref_mixed)

    # Full-bf16 path with N not a multiple of the bf16 sublane tile (16): exercises
    # the dtype-aware round-up and the last-tile padded-row masking.
    pred_bf16 = pred.astype(jnp.bfloat16)
    out_bf16 = jax.block_until_ready(focal_loss(pred_bf16, teacher_bf16))
    ref_bf16 = focal_loss_ref(pred_bf16.astype(jnp.float32),
                              teacher_bf16.astype(jnp.float32))
    assert jnp.allclose(out_bf16, ref_bf16, atol=1e-5, rtol=1e-5), (out_bf16, ref_bf16)

    print("KERNEL_OK")
</pallas_src>

<mosaic_0001>
module attributes {stable_mosaic.version = 11 : i64} {
  func.func @_focal_ce_kernel(%arg0: i32, %arg1: memref<8x16xf32, #tpu.memory_space<vmem>>, %arg2: memref<8x16xf32, #tpu.memory_space<vmem>>, %arg3: memref<1x1xf32, #tpu.memory_space<vmem>>) attributes {dimension_semantics = [#tpu.dimension_semantics<arbitrary>], iteration_bounds = array<i64: 1>, scalar_prefetch = 0 : i64, scratch_operands = 0 : i64, tpu.core_type = #tpu.core_type<tc>, window_params = [{transform_indices = @transform_0, window_bounds = array<i64: 8, 16>}, {transform_indices = @transform_1, window_bounds = array<i64: 8, 16>}, {pipeline_mode = #tpu.pipeline_mode<synchronous>, transform_indices = @transform_2, window_bounds = array<i64: 1, 1>}]} {
    %c0 = arith.constant 0 : index
    %c0_0 = arith.constant 0 : index
    %0 = vector.load %arg1[%c0, %c0_0] : memref<8x16xf32, #tpu.memory_space<vmem>>, vector<8x16xf32>
    %c0_1 = arith.constant 0 : index
    %c0_2 = arith.constant 0 : index
    %1 = vector.load %arg2[%c0_1, %c0_2] : memref<8x16xf32, #tpu.memory_space<vmem>>, vector<8x16xf32>
    %2 = tpu.iota {dimensions = array<i32: 1>} : vector<8x16xi32>
    %cst = arith.constant dense<0xFF800000> : vector<8xf32>
    %3 = vector.multi_reduction <maximumf>, %1, %cst [1] : vector<8x16xf32> to vector<8xf32>
    %4 = vector.shape_cast %3 : vector<8xf32> to vector<8x1xf32>
    %5 = vector.broadcast %4 : vector<8x1xf32> to vector<8x16xf32>
    %6 = arith.cmpf oeq, %1, %5 : vector<8x16xf32>
    %c16_i32 = arith.constant 16 : i32
    %7 = vector.broadcast %c16_i32 : i32 to vector<8x16xi32>
    %8 = arith.select %6, %2, %7 : vector<8x16xi1>, vector<8x16xi32>
    %cst_3 = arith.constant dense<2147483647> : vector<8xi32>
    %9 = vector.multi_reduction <minsi>, %8, %cst_3 [1] : vector<8x16xi32> to vector<8xi32>
    %10 = vector.shape_cast %9 : vector<8xi32> to vector<8x1xi32>
    %11 = vector.broadcast %10 : vector<8x1xi32> to vector<8x16xi32>
    %12 = arith.cmpi eq, %2, %11 : vector<8x16xi32>
    %cst_4 = arith.constant 0.000000e+00 : f32
    %13 = vector.broadcast %cst_4 : f32 to vector<8x16xf32>
    %14 = arith.select %12, %0, %13 : vector<8x16xi1>, vector<8x16xf32>
    %cst_5 = arith.constant dense<0.000000e+00> : vector<8xf32>
    %15 = vector.multi_reduction <add>, %14, %cst_5 [1] : vector<8x16xf32> to vector<8xf32>
    %16 = vector.shape_cast %15 : vector<8xf32> to vector<8x1xf32>
    %cst_6 = arith.constant dense<0xFF800000> : vector<8xf32>
    %17 = vector.multi_reduction <maximumf>, %0, %cst_6 [1] : vector<8x16xf32> to vector<8xf32>
    %18 = vector.shape_cast %17 : vector<8xf32> to vector<8x1xf32>
    %19 = vector.broadcast %18 : vector<8x1xf32> to vector<8x16xf32>
    %20 = arith.subf %0, %19 : vector<8x16xf32>
    %21 = math.exp %20 : vector<8x16xf32>
    %cst_7 = arith.constant dense<0.000000e+00> : vector<8xf32>
    %22 = vector.multi_reduction <add>, %21, %cst_7 [1] : vector<8x16xf32> to vector<8xf32>
    %23 = vector.shape_cast %22 : vector<8xf32> to vector<8x1xf32>
    %24 = math.log %23 : vector<8x1xf32>
    %25 = arith.addf %18, %24 : vector<8x1xf32>
    %26 = arith.subf %25, %16 : vector<8x1xf32>
    %cst_8 = arith.constant dense<0.000000e+00> : vector<1xf32>
    %27 = vector.multi_reduction <add>, %26, %cst_8 [0] : vector<8x1xf32> to vector<1xf32>
    %28 = vector.shape_cast %27 : vector<1xf32> to vector<1x1xf32>
    %c0_i32 = arith.constant 0 : i32
    %29 = arith.cmpi eq, %arg0, %c0_i32 : i32
    %30 = arith.extui %29 : i1 to i32
    %c0_i32_9 = arith.constant 0 : i32
    %31 = arith.cmpi ne, %30, %c0_i32_9 : i32
    scf.if %31 {
      %cst_14 = arith.constant 0.000000e+00 : f32
      %35 = vector.broadcast %cst_14 : f32 to vector<1x1xf32>
      %c0_15 = arith.constant 0 : index
      %c0_16 = arith.constant 0 : index
      %36 = vector.load %arg3[%c0_15, %c0_16] : memref<1x1xf32, #tpu.memory_space<vmem>>, vector<1x1xf32>
      tpu.vector_store %arg3[%c0_15, %c0_16], %35 {strides = array<i32>} : memref<1x1xf32, #tpu.memory_space<vmem>>, vector<1x1xf32>,
    } else {
    }
    %c0_10 = arith.constant 0 : index
    %c0_11 = arith.constant 0 : index
    %32 = vector.load %arg3[%c0_10, %c0_11] : memref<1x1xf32, #tpu.memory_space<vmem>>, vector<1x1xf32>
    %33 = arith.addf %32, %28 : vector<1x1xf32>
    %c0_12 = arith.constant 0 : index
    %c0_13 = arith.constant 0 : index
    %34 = vector.load %arg3[%c0_12, %c0_13] : memref<1x1xf32, #tpu.memory_space<vmem>>, vector<1x1xf32>
    tpu.vector_store %arg3[%c0_12, %c0_13], %33 {strides = array<i32>} : memref<1x1xf32, #tpu.memory_space<vmem>>, vector<1x1xf32>,
    return
  }
  func.func @transform_0(%arg0: i32) -> (i32, i32) {
    %c0_i32 = arith.constant 0 : i32
    %c0_i32_0 = arith.constant 0 : i32
    return %arg0, %c0_i32 : i32, i32
  }
  func.func @transform_1(%arg0: i32) -> (i32, i32) {
    %c0_i32 = arith.constant 0 : i32
    %c0_i32_0 = arith.constant 0 : i32
    return %arg0, %c0_i32 : i32, i32
  }
  func.func @transform_2(%arg0: i32) -> (i32, i32) {
    %c0_i32 = arith.constant 0 : i32
    %c0_i32_0 = arith.constant 0 : i32
    %c0_i32_1 = arith.constant 0 : i32
    return %c0_i32, %c0_i32_0 : i32, i32
  }
}

</mosaic_0001>

<llo_original>
// kernel: focal_loss.1
$region0: #{focal_loss.1}
  #allocation0 [shape = 'u32[]', space=smem, size = 0x4, offset = 0x4, fixed_abs, tag = 'smem constant byte address 0x4 - core index']
  #allocation1 [shape = 'u32[144,128]{1,0:T(1,128)}', space=vmem, size = 0x12000, scoped, tag = 'internal scratch']
  %s0 = inlined_call_operand.hbm [shape: f32[8,16], index: 0, kind: input, shape index: {}]
  %s1 = inlined_call_operand.hbm [shape: f32[8,16], index: 1, kind: input, shape index: {}]
  %s2 = inlined_call_operand.hbm [shape: f32[1,1], index: 2, kind: output, shape index: {}]
  %s3 = sld [smem:[#allocation0]]
  $region30: #{focal_loss.1} parent=0
    _
  %s5 = ssub.s32 1, %s3
  %s6 = scalar_select 0, %s5, %s3
  $region1: #{focal_loss.1} parent=0
    #allocation2 [shape = 'u8[4096]{0}', space=vmem, size = 0x1000, scoped, tag = 'input window, operand 0, single buffered']
    #allocation3 [shape = 's32[1]{0}', space=sflag, size = 0x4, scoped, tag = 'scoped memory for focal_loss.1']
    #allocation4 [shape = 's32[1]{0}', space=sflag, size = 0x4, scoped, tag = 'scoped memory for focal_loss.1']
    #allocation5 [shape = 'u8[4096]{0}', space=vmem, size = 0x1000, scoped, tag = 'input window, operand 1, single buffered']
    #allocation6 [shape = 's32[1]{0}', space=sflag, size = 0x4, scoped, tag = 'scoped memory for focal_loss.1']
    #allocation7 [shape = 'u8[512]{0}', space=vmem, size = 0x400, scoped, tag = 'output window, operand 0, single buffered']
    %7 = vsyncpa [#allocation3], 0
    %8 = vsyncpa [#allocation6], 0
    %9 = vsyncpa [#allocation4], 0
    // Predicated region
    $region2: #{focal_loss.1} parent=1 // pred_check
      _
    $region3: #{focal_loss.1} parent=1 // pred_check_branch
      %11 = sbr.rel (0) target = $region5
    $region4: #{focal_loss.1} parent=1 // pred_region
      %s13 = ssub.s32 128, 128
      %14 = vsyncadd [#allocation3], %s13
      %s16 = sshll.u32 [#allocation2], 4
      %s17 = int_to_ptr.vmem [resolvable:$true] %s16
      %19 = dma.hbm_to_vmem [thread:$0]  %s0, 128, %s17, [#allocation3]
    $region5: #{focal_loss.1} parent=1 // pred_fallthru
      _
    // Predicated region
    $region6: #{focal_loss.1} parent=1 // pred_check
      _
    $region7: #{focal_loss.1} parent=1 // pred_check_branch
      %21 = sbr.rel (0) target = $region9
    $region8: #{focal_loss.1} parent=1 // pred_region
      %s23 = ssub.s32 128, 128
      %24 = vsyncadd [#allocation6], %s23
      %s26 = sshll.u32 [#allocation5], 4
      %s27 = int_to_ptr.vmem [resolvable:$true] %s26
      %29 = dma.hbm_to_vmem [thread:$0]  %s1, 128, %s27, [#allocation6]
    $region9: #{focal_loss.1} parent=1 // pred_fallthru
      _
    // Predicated region
    $region10: #{focal_loss.1} parent=1 // pred_check
      _
    $region11: #{focal_loss.1} parent=1 // pred_check_branch
      %31 = sbr.rel (0) target = $region13
    $region12: #{focal_loss.1} parent=1 // pred_region
      %32 = dma.done [#allocation3], 128
    $region13: #{focal_loss.1} parent=1 // pred_fallthru
      _
    // Predicated region
    $region14: #{focal_loss.1} parent=1 // pred_check
      _
    $region15: #{focal_loss.1} parent=1 // pred_check_branch
      %34 = sbr.rel (0) target = $region17
    $region16: #{focal_loss.1} parent=1 // pred_region
      %35 = dma.done [#allocation6], 128
    $region17: #{focal_loss.1} parent=1 // pred_fallthru
      _
    %v36 = vld [vmem:[#allocation2] sm:$0xff]
    %v37 = vld [vmem:[#allocation5] sm:$0xff]
    %v38 = vlaneseq
    %v39 = vand.u32 %v38, 127
    %vm40 = vcmask 130048
    %v41 = vsel %vm40, %v37, -inf
    %42 = vmax.xlane.f32.xlu0 %v41
    %v43 = vpop.xlane.xlu0 %42
    %vm44 = vcmp.eq.f32.partialorder %v37, %v43
    %v45 = vsel %vm44, %v39, 16
    %v46 = vsel %vm40, %v45, 2147483647
    %v47 = vand.u32 %v46, 65535
    %v48 = vshra.s32 %v46, 16
    %v49 = vcvt.s32.f32 %v47
    %v50 = vcvt.s32.f32 %v48
    %51 = vmin.xlane.f32.xlu0 %v50
    %v52 = vpop.xlane.xlu0 %51
    %vm53 = vcmp.eq.f32.partialorder %v50, %v52
    %v54 = vsel %vm53, %v49, inf
    %55 = vmin.xlane.f32.xlu0 %v54
    %v56 = vpop.xlane.xlu0 %55
    %v57 = vcvt.f32.s32 %v56
    %v58 = vcvt.f32.s32 %v52
    %v59 = vshll.u32 %v58, 16
    %v60 = vadd.s32 %v59, %v57
    %vm61 = vcmp.eq.s32.totalorder %v39, %v60
    %v62 = vsel %vm61, %v36, 0.0
    %v63 = vsel %vm40, %v62, 0.0
    %64 = vadd.xlane.f32.xlu0 %v63
    %v65 = vpop.xlane.xlu0 %64
    %v66 = vsel %vm40, %v36, -inf
    %67 = vmax.xlane.f32.xlu0 %v66
    %v68 = vpop.xlane.xlu0 %67
    %v69 = vsub.f32 %v36, %v68
    %v70 = vmul.f32 %v69, 1.442695
    %v71 = vpow.pop %v70
    %v72 = vsel %vm40, %v71, 0.0
    %73 = vadd.xlane.f32.xlu0 %v72
    %v74 = vpop.xlane.xlu0 %73
    %v75 = vlog2.pop %v74
    %v76 = vmul.f32 %v75, 0.6931472
    %v77 = vadd.f32 %v68, %v76
    %v78 = vsub.f32 %v77, %v65
    %v79 = vrot.slane %v78, 4
    %v80 = vadd.f32 %v78, %v79
    %v81 = vrot.slane %v80, 2
    %v82 = vadd.f32 %v80, %v81
    %v83 = vrot.slane %v82, 1
    %v84 = vadd.f32 %v82, %v83
    %p85 = scmp.eq.s32.totalorder 0, 0
    // Predicated region
    $region18: #{focal_loss.1} parent=1 // pred_check
      %p86 = pneg %p85
    $region19: #{focal_loss.1} parent=1 // pred_check_branch
      %88 = sbr.rel (%p86) target = $region21
    $region20: #{focal_loss.1} parent=1 // pred_region
      %vm89 = vcmask 0
      %90 = vst.msk [vmem:[#allocation7] sm:$0x1] %vm89, 0.0
    $region21: #{focal_loss.1} parent=1 // pred_fallthru
      _
    %v91 = vld [vmem:[#allocation7] sm:$0x1]
    %v92 = vadd.f32 %v91, %v84
    %vm93 = vcmask 0
    %94 = vst.msk [vmem:[#allocation7] sm:$0x1] %vm93, %v92
    // Predicated region
    $region22: #{focal_loss.1} parent=1 // pred_check
      _
    $region23: #{focal_loss.1} parent=1 // pred_check_branch
      %96 = sbr.rel (0) target = $region25
    $region24: #{focal_loss.1} parent=1 // pred_region
      %s98 = ssub.s32 16, 16
      %99 = vsyncadd [#allocation4], %s98
      %s101 = sshll.u32 [#allocation7], 4
      %s102 = int_to_ptr.vmem [resolvable:$true] %s101
      %104 = dma.vmem_to_hbm [thread:$0]  %s102, 16, %s2, [#allocation4]
    $region25: #{focal_loss.1} parent=1 // pred_fallthru
      _
    // Predicated region
    $region26: #{focal_loss.1} parent=1 // pred_check
      _
    $region27: #{focal_loss.1} parent=1 // pred_check_branch
      %106 = sbr.rel (0) target = $region29
    $region28: #{focal_loss.1} parent=1 // pred_region
      %107 = dma.done [#allocation4], 16
    $region29: #{focal_loss.1} parent=1 // pred_fallthru
      _
    %108 = vsyncpa [#allocation3], 1
    %109 = vsyncpa [#allocation6], 1
    %110 = vsyncpa [#allocation4], 1

</llo_original>
